<compile_context>
chip_gen: v7x
topology: tpu7x:2x2x1
jax: 0.10.0
libtpu: 0.0.40
codegen_flags: <defaults>
</compile_context>

<pallas_src>
import functools

import jax
import jax.numpy as jnp
from jax import lax
from jax.experimental import pallas as pl
from jax.experimental.pallas import tpu as pltpu

TAU = 1.0            # module default temperature
REDUCTION = "mean"   # module default reduction
_EPS_COSSIM = 1e-8   # torch.nn.functional.cosine_similarity eps
_EPS_NORM = 1e-12    # torch.nn.functional.normalize eps


def _triplet_kernel(a_ref, p_ref, r_ref, out_ref, acc_ref, cos_ref, *, inv_tau):
    j = pl.program_id(1)
    nc = pl.num_programs(1)
    mm_dtype = a_ref.dtype
    inv_tau = jnp.float32(inv_tau)

    # ---- lhs: F.normalize(anchor_tile, dim=1) via rsqrt-multiply ------------
    a = a_ref[...].astype(jnp.float32)                            # [TB, D]
    sq_a = jnp.sum(a * a, axis=1, keepdims=True)                  # [TB, 1]
    a_n = a * lax.rsqrt(jnp.maximum(sq_a, jnp.float32(_EPS_NORM * _EPS_NORM)))
    # Fold 1/tau into the [TB, D] lhs once (cheaper than scaling the logits).
    lhs = (a_n * inv_tau).astype(mm_dtype)

    @pl.when(j == 0)
    def _init():
        # D1 = exp(cosine_similarity(anchor, pos) / tau).  torch clamps the
        # product of squared norms at eps^2 and applies rsqrt.
        p = p_ref[...].astype(jnp.float32)
        sq_p = jnp.sum(p * p, axis=1, keepdims=True)
        w12 = jnp.sum(a * p, axis=1, keepdims=True)
        cos_ap = w12 * lax.rsqrt(
            jnp.maximum(sq_a * sq_p, jnp.float32(_EPS_COSSIM * _EPS_COSSIM)))
        scaled_cos = cos_ap * inv_tau
        cos_ref[...] = scaled_cos
        d1 = jnp.exp(scaled_cos)
        # diag of exp(a_n @ a_n.T / tau) is exp(||a_n_i||^2 / tau): subtract it
        # analytically instead of building an iota mask over a [TB, B] block.
        diag = jnp.exp(jnp.sum(a_n * a_n, axis=1, keepdims=True) * inv_tau)
        acc_ref[...] = d1 - diag

    # ---- rhs: normalized column tile of concat([neg, anchor], axis=0) -------
    r = r_ref[...].astype(jnp.float32)                            # [TC, D]
    sq_r = jnp.sum(r * r, axis=1, keepdims=True)
    rhs = (r * lax.rsqrt(jnp.maximum(sq_r, jnp.float32(_EPS_NORM * _EPS_NORM)))
           ).astype(mm_dtype)

    # Single fused MXU call covering both the anchor-neg (D2) and the
    # anchor-anchor (D3) similarity blocks for this column tile.
    logits = lax.dot_general(lhs, rhs, (((1,), (1,)), ((), ())),
                             preferred_element_type=jnp.float32)  # [TB, TC]
    acc_ref[...] += jnp.sum(jnp.exp(logits), axis=1, keepdims=True)

    @pl.when(j == nc - 1)
    def _finalize():
        # -log(D1 / (D1 + D2 + D3)) == log(D1 + D2 + D3) - cos/tau
        loss_rows = jnp.log(acc_ref[...]) - cos_ref[...]          # [TB, 1]
        partial = jnp.sum(loss_rows)
        # Lane-dense (1, 8, 128) store of the per-row-tile partial sum.
        out_ref[...] = jnp.zeros(out_ref.shape, jnp.float32) + partial


def _pick_tile(n, candidates=(256, 128, 64, 32, 16, 8)):
    for c in candidates:
        if n % c == 0:
            return c
    return n  # fall back to the full (untiled) extent


def triplet_loss_pallas(anchor, pos, neg, *, tau=TAU, reduction=REDUCTION):
    """Pallas forward of TripletLossInLatentSpaceCosSimv2_plus2 (anchor_detach=True)."""
    anchor = lax.stop_gradient(anchor)   # anchor_detach=True (forward no-op)
    B, D = anchor.shape

    # D2 and D3 share the same lhs (normalized anchor rows); stacking neg and
    # anchor lets a single matmul / exp / row-sum cover both.
    rhs_cat = jnp.concatenate([neg, anchor], axis=0)              # [2B, D]

    TB = _pick_tile(B)          # anchor-row tile
    TC = _pick_tile(2 * B)      # rhs-row (column-of-logits) tile
    nr, nc = B // TB, (2 * B) // TC

    out = pl.pallas_call(
        functools.partial(_triplet_kernel, inv_tau=1.0 / tau),
        out_shape=jax.ShapeDtypeStruct((nr, 8, 128), jnp.float32),
        grid=(nr, nc),
        in_specs=[
            pl.BlockSpec((TB, D), lambda i, j: (i, 0)),   # anchor row tile (lhs)
            pl.BlockSpec((TB, D), lambda i, j: (i, 0)),   # pos row tile
            pl.BlockSpec((TC, D), lambda i, j: (j, 0)),   # [neg; anchor] col tile
        ],
        out_specs=pl.BlockSpec((1, 8, 128), lambda i, j: (i, 0, 0)),
        scratch_shapes=[
            pltpu.VMEM((TB, 1), jnp.float32),   # denominator accumulator
            pltpu.VMEM((TB, 1), jnp.float32),   # cos_ap / tau
        ],
        compiler_params=pltpu.CompilerParams(
            dimension_semantics=("parallel", "arbitrary"),
            vmem_limit_bytes=64 * 1024 * 1024,
        ),
    )(anchor, pos, rhs_cat)

    total = jnp.sum(out[:, 0, 0])
    if reduction == "mean":
        return total / jnp.float32(B)
    elif reduction == "sum":
        return total
    raise ValueError(f"Invalid reduction: {reduction}")


def triplet_loss_ref(anchor, pos, neg, tau=TAU, reduction=REDUCTION):
    """Pure-JAX reference mirroring the PyTorch forward."""
    a = anchor.astype(jnp.float32)
    p = pos.astype(jnp.float32)
    n = neg.astype(jnp.float32)
    sq_a = jnp.sum(a * a, axis=1, keepdims=True)
    sq_p = jnp.sum(p * p, axis=1, keepdims=True)
    cos_ap = jnp.sum(a * p, axis=1, keepdims=True) / jnp.sqrt(
        jnp.maximum(sq_a * sq_p, _EPS_COSSIM ** 2))
    d1 = jnp.exp(cos_ap / tau)
    a_n = a / jnp.maximum(jnp.sqrt(sq_a), _EPS_NORM)
    n_n = n / jnp.maximum(jnp.linalg.norm(n, axis=1, keepdims=True), _EPS_NORM)
    d2 = jnp.sum(jnp.exp(a_n @ n_n.T / tau), axis=1, keepdims=True)
    e_aa = jnp.exp(a_n @ a_n.T / tau)
    e_aa = e_aa - jnp.diag(jnp.diag(e_aa))
    d3 = jnp.sum(e_aa, axis=1, keepdims=True)
    triplet = -jnp.log(d1 / (d1 + d2 + d3))
    if reduction == "mean":
        return jnp.mean(triplet)
    return jnp.sum(triplet)


if __name__ == "__main__":
    B, D = 8, 128
    key = jax.random.PRNGKey(0)
    ka, kp, kn = jax.random.split(key, 3)
    anchor = jax.random.normal(ka, (B, D), dtype=jnp.float32)
    pos = jax.random.normal(kp, (B, D), dtype=jnp.float32)
    neg = jax.random.normal(kn, (B, D), dtype=jnp.float32)

    out = jax.block_until_ready(triplet_loss_pallas(anchor, pos, neg))
    ref = jax.block_until_ready(triplet_loss_ref(anchor, pos, neg))
    assert jnp.allclose(out, ref, rtol=1e-5, atol=3e-5), (out, ref)
    print("KERNEL_OK")
</pallas_src>

<mosaic_0001>
module attributes {stable_mosaic.version = 11 : i64} {
  func.func @_triplet_kernel(%arg0: i32, %arg1: i32, %arg2: memref<8x128xf32, #tpu.memory_space<vmem>>, %arg3: memref<8x128xf32, #tpu.memory_space<vmem>>, %arg4: memref<16x128xf32, #tpu.memory_space<vmem>>, %arg5: memref<1x8x128xf32, #tpu.memory_space<vmem>>, %arg6: memref<8x1xf32, #tpu.memory_space<vmem>>, %arg7: memref<8x1xf32, #tpu.memory_space<vmem>>) attributes {dimension_semantics = [#tpu.dimension_semantics<parallel>, #tpu.dimension_semantics<arbitrary>], iteration_bounds = array<i64: 1, 1>, scalar_prefetch = 0 : i64, scratch_operands = 2 : i64, tpu.core_type = #tpu.core_type<tc>, window_params = [{transform_indices = @transform_0, window_bounds = array<i64: 8, 128>}, {transform_indices = @transform_1, window_bounds = array<i64: 8, 128>}, {transform_indices = @transform_2, window_bounds = array<i64: 16, 128>}, {transform_indices = @transform_3, window_bounds = array<i64: 1, 8, 128>}]} {
    %c0 = arith.constant 0 : index
    %c0_0 = arith.constant 0 : index
    %0 = vector.load %arg2[%c0, %c0_0] : memref<8x128xf32, #tpu.memory_space<vmem>>, vector<8x128xf32>
    %1 = arith.mulf %0, %0 : vector<8x128xf32>
    %cst = arith.constant dense<0.000000e+00> : vector<8xf32>
    %2 = vector.multi_reduction <add>, %1, %cst [1] : vector<8x128xf32> to vector<8xf32>
    %3 = vector.shape_cast %2 : vector<8xf32> to vector<8x1xf32>
    %cst_1 = arith.constant 1.000000e-24 : f32
    %4 = vector.broadcast %cst_1 : f32 to vector<8x1xf32>
    %5 = arith.maximumf %3, %4 : vector<8x1xf32>
    %6 = math.rsqrt %5 : vector<8x1xf32>
    %7 = vector.broadcast %6 : vector<8x1xf32> to vector<8x128xf32>
    %8 = arith.mulf %0, %7 : vector<8x128xf32>
    %cst_2 = arith.constant 1.000000e+00 : f32
    %9 = vector.broadcast %cst_2 : f32 to vector<8x128xf32>
    %10 = arith.mulf %8, %9 : vector<8x128xf32>
    %c0_i32 = arith.constant 0 : i32
    %11 = arith.cmpi eq, %arg1, %c0_i32 : i32
    %12 = arith.extui %11 : i1 to i32
    %cst_3 = arith.constant 1.000000e+00 : f32
    %c0_i32_4 = arith.constant 0 : i32
    %13 = arith.cmpi ne, %12, %c0_i32_4 : i32
    scf.if %13 {
      %c0_17 = arith.constant 0 : index
      %c0_18 = arith.constant 0 : index
      %33 = vector.load %arg3[%c0_17, %c0_18] : memref<8x128xf32, #tpu.memory_space<vmem>>, vector<8x128xf32>
      %34 = arith.mulf %33, %33 : vector<8x128xf32>
      %cst_19 = arith.constant dense<0.000000e+00> : vector<8xf32>
      %35 = vector.multi_reduction <add>, %34, %cst_19 [1] : vector<8x128xf32> to vector<8xf32>
      %36 = vector.shape_cast %35 : vector<8xf32> to vector<8x1xf32>
      %37 = arith.mulf %0, %33 : vector<8x128xf32>
      %cst_20 = arith.constant dense<0.000000e+00> : vector<8xf32>
      %38 = vector.multi_reduction <add>, %37, %cst_20 [1] : vector<8x128xf32> to vector<8xf32>
      %39 = vector.shape_cast %38 : vector<8xf32> to vector<8x1xf32>
      %40 = arith.mulf %3, %36 : vector<8x1xf32>
      %cst_21 = arith.constant 1.000000e-16 : f32
      %41 = vector.broadcast %cst_21 : f32 to vector<8x1xf32>
      %42 = arith.maximumf %40, %41 : vector<8x1xf32>
      %43 = math.rsqrt %42 : vector<8x1xf32>
      %44 = arith.mulf %39, %43 : vector<8x1xf32>
      %45 = vector.broadcast %cst_3 : f32 to vector<8x1xf32>
      %46 = arith.mulf %44, %45 : vector<8x1xf32>
      %c0_22 = arith.constant 0 : index
      %c0_23 = arith.constant 0 : index
      %47 = vector.load %arg7[%c0_22, %c0_23] : memref<8x1xf32, #tpu.memory_space<vmem>>, vector<8x1xf32>
      tpu.vector_store %arg7[%c0_22, %c0_23], %46 {strides = array<i32>} : memref<8x1xf32, #tpu.memory_space<vmem>>, vector<8x1xf32>,
      %48 = math.exp %46 : vector<8x1xf32>
      %49 = arith.mulf %8, %8 : vector<8x128xf32>
      %cst_24 = arith.constant dense<0.000000e+00> : vector<8xf32>
      %50 = vector.multi_reduction <add>, %49, %cst_24 [1] : vector<8x128xf32> to vector<8xf32>
      %51 = vector.shape_cast %50 : vector<8xf32> to vector<8x1xf32>
      %52 = vector.broadcast %cst_3 : f32 to vector<8x1xf32>
      %53 = arith.mulf %51, %52 : vector<8x1xf32>
      %54 = math.exp %53 : vector<8x1xf32>
      %55 = arith.subf %48, %54 : vector<8x1xf32>
      %c0_25 = arith.constant 0 : index
      %c0_26 = arith.constant 0 : index
      %56 = vector.load %arg6[%c0_25, %c0_26] : memref<8x1xf32, #tpu.memory_space<vmem>>, vector<8x1xf32>
      tpu.vector_store %arg6[%c0_25, %c0_26], %55 {strides = array<i32>} : memref<8x1xf32, #tpu.memory_space<vmem>>, vector<8x1xf32>,
    } else {
    }
    %c0_5 = arith.constant 0 : index
    %c0_6 = arith.constant 0 : index
    %14 = vector.load %arg4[%c0_5, %c0_6] : memref<16x128xf32, #tpu.memory_space<vmem>>, vector<16x128xf32>
    %15 = arith.mulf %14, %14 : vector<16x128xf32>
    %cst_7 = arith.constant dense<0.000000e+00> : vector<16xf32>
    %16 = vector.multi_reduction <add>, %15, %cst_7 [1] : vector<16x128xf32> to vector<16xf32>
    %17 = vector.shape_cast %16 : vector<16xf32> to vector<16x1xf32>
    %cst_8 = arith.constant 1.000000e-24 : f32
    %18 = vector.broadcast %cst_8 : f32 to vector<16x1xf32>
    %19 = arith.maximumf %17, %18 : vector<16x1xf32>
    %20 = math.rsqrt %19 : vector<16x1xf32>
    %21 = vector.broadcast %20 : vector<16x1xf32> to vector<16x128xf32>
    %22 = arith.mulf %14, %21 : vector<16x128xf32>
    %cst_9 = arith.constant dense<0.000000e+00> : vector<8x16xf32>
    %23 = tpu.matmul %10, %22, %cst_9 {dimension_numbers = #tpu.dot_dimension_numbers<[1], [1], [0], [0], [0, 0, 1, 0], [], []>} : vector<8x128xf32>, vector<16x128xf32>, vector<8x16xf32> -> vector<8x16xf32>
    %c0_10 = arith.constant 0 : index
    %c0_11 = arith.constant 0 : index
    %24 = vector.load %arg6[%c0_10, %c0_11] : memref<8x1xf32, #tpu.memory_space<vmem>>, vector<8x1xf32>
    %25 = math.exp %23 : vector<8x16xf32>
    %cst_12 = arith.constant dense<0.000000e+00> : vector<8xf32>
    %26 = vector.multi_reduction <add>, %25, %cst_12 [1] : vector<8x16xf32> to vector<8xf32>
    %27 = vector.shape_cast %26 : vector<8xf32> to vector<8x1xf32>
    %28 = arith.addf %24, %27 : vector<8x1xf32>
    %c0_13 = arith.constant 0 : index
    %c0_14 = arith.constant 0 : index
    %29 = vector.load %arg6[%c0_13, %c0_14] : memref<8x1xf32, #tpu.memory_space<vmem>>, vector<8x1xf32>
    tpu.vector_store %arg6[%c0_13, %c0_14], %28 {strides = array<i32>} : memref<8x1xf32, #tpu.memory_space<vmem>>, vector<8x1xf32>,
    %c0_i32_15 = arith.constant 0 : i32
    %30 = arith.cmpi eq, %arg1, %c0_i32_15 : i32
    %31 = arith.extui %30 : i1 to i32
    %c0_i32_16 = arith.constant 0 : i32
    %32 = arith.cmpi ne, %31, %c0_i32_16 : i32
    scf.if %32 {
      %c0_17 = arith.constant 0 : index
      %c0_18 = arith.constant 0 : index
      %33 = vector.load %arg6[%c0_17, %c0_18] : memref<8x1xf32, #tpu.memory_space<vmem>>, vector<8x1xf32>
      %34 = math.log %33 : vector<8x1xf32>
      %c0_19 = arith.constant 0 : index
      %c0_20 = arith.constant 0 : index
      %35 = vector.load %arg7[%c0_19, %c0_20] : memref<8x1xf32, #tpu.memory_space<vmem>>, vector<8x1xf32>
      %36 = arith.subf %34, %35 : vector<8x1xf32>
      %37 = vector.shape_cast %36 : vector<8x1xf32> to vector<1x8x1xf32>
      %cst_21 = arith.constant dense<0.000000e+00> : vector<1xf32>
      %38 = vector.multi_reduction <add>, %37, %cst_21 [1, 2] : vector<1x8x1xf32> to vector<1xf32>
      %39 = vector.shape_cast %38 : vector<1xf32> to vector<1x1x1xf32>
      %40 = vector.extract %39[0, 0, 0] : f32 from vector<1x1x1xf32>
      %cst_22 = arith.constant 0.000000e+00 : f32
      %41 = vector.broadcast %cst_22 : f32 to vector<1x8x128xf32>
      %42 = vector.broadcast %40 : f32 to vector<1x8x128xf32>
      %43 = arith.addf %41, %42 : vector<1x8x128xf32>
      %c0_23 = arith.constant 0 : index
      %c0_24 = arith.constant 0 : index
      %c0_25 = arith.constant 0 : index
      %44 = vector.load %arg5[%c0_23, %c0_24, %c0_25] : memref<1x8x128xf32, #tpu.memory_space<vmem>>, vector<1x8x128xf32>
      tpu.vector_store %arg5[%c0_23, %c0_24, %c0_25], %43 {strides = array<i32>} : memref<1x8x128xf32, #tpu.memory_space<vmem>>, vector<1x8x128xf32>,
    } else {
    }
    return
  }
  func.func @transform_0(%arg0: i32, %arg1: i32) -> (i32, i32) {
    %c0_i32 = arith.constant 0 : i32
    %c0_i32_0 = arith.constant 0 : i32
    return %arg0, %c0_i32 : i32, i32
  }
  func.func @transform_1(%arg0: i32, %arg1: i32) -> (i32, i32) {
    %c0_i32 = arith.constant 0 : i32
    %c0_i32_0 = arith.constant 0 : i32
    return %arg0, %c0_i32 : i32, i32
  }
  func.func @transform_2(%arg0: i32, %arg1: i32) -> (i32, i32) {
    %c0_i32 = arith.constant 0 : i32
    %c0_i32_0 = arith.constant 0 : i32
    return %arg1, %c0_i32 : i32, i32
  }
  func.func @transform_3(%arg0: i32, %arg1: i32) -> (i32, i32, i32) {
    %c0_i32 = arith.constant 0 : i32
    %c0_i32_0 = arith.constant 0 : i32
    %c0_i32_1 = arith.constant 0 : i32
    return %arg0, %c0_i32, %c0_i32_0 : i32, i32, i32
  }
}

</mosaic_0001>

<llo_original>
// kernel: tpu_custom_call.1
$region0: #{tpu_custom_call.1}
  #allocation0 [shape = 'u32[]', space=smem, size = 0x4, offset = 0x4, fixed_abs, tag = 'smem constant byte address 0x4 - core index']
  #allocation1 [shape = 'u32[144,128]{1,0:T(1,128)}', space=vmem, size = 0x12000, scoped, tag = 'internal scratch']
  #allocation2 [shape = 'f32[8,1]{1,0:T(8,128)}', space=vmem, size = 0x1000, scoped, tag = 'scratch operand']
  #allocation3 [shape = 'f32[8,1]{1,0:T(8,128)}', space=vmem, size = 0x1000, scoped, tag = 'scratch operand']
  %s0 = inlined_call_operand.hbm [shape: f32[8,128], index: 0, kind: input, shape index: {}]
  %s1 = inlined_call_operand.hbm [shape: f32[8,128], index: 1, kind: input, shape index: {}]
  %s2 = inlined_call_operand.hbm [shape: f32[16,128], index: 2, kind: input, shape index: {}]
  %s3 = inlined_call_operand.hbm [shape: f32[1,8,128], index: 3, kind: output, shape index: {}]
  %s4 = sld [smem:[#allocation0]]
  $region42: #{tpu_custom_call.1} parent=0
    _
  %s6 = ssub.s32 1, %s4
  %s7 = scalar_select 0, %s6, %s4
  $region1: #{tpu_custom_call.1} parent=0
    #allocation4 [shape = 'u8[4096]{0}', space=vmem, size = 0x1000, scoped, tag = 'input window, operand 0, single buffered']
    #allocation5 [shape = 's32[1]{0}', space=sflag, size = 0x4, scoped, tag = 'scoped memory for tpu_custom_call.1']
    #allocation6 [shape = 's32[1]{0}', space=sflag, size = 0x4, scoped, tag = 'scoped memory for tpu_custom_call.1']
    #allocation7 [shape = 'u8[4096]{0}', space=vmem, size = 0x1000, scoped, tag = 'input window, operand 1, single buffered']
    #allocation8 [shape = 's32[1]{0}', space=sflag, size = 0x4, scoped, tag = 'scoped memory for tpu_custom_call.1']
    #allocation9 [shape = 'u8[8192]{0}', space=vmem, size = 0x2000, scoped, tag = 'input window, operand 2, single buffered']
    #allocation10 [shape = 'u8[4096]{0}', space=vmem, size = 0x1000, scoped, tag = 'output window, operand 0, single buffered']
    %8 = vsyncpa [#allocation5], 0
    %9 = vsyncpa [#allocation8], 0
    %10 = vsyncpa [#allocation6], 0
    // Predicated region
    $region2: #{tpu_custom_call.1} parent=1 // pred_check
      _
    $region3: #{tpu_custom_call.1} parent=1 // pred_check_branch
      %12 = sbr.rel (0) target = $region5
    $region4: #{tpu_custom_call.1} parent=1 // pred_region
      %s14 = ssub.s32 128, 128
      %15 = vsyncadd [#allocation5], %s14
      %s17 = sshll.u32 [#allocation4], 4
      %s18 = int_to_ptr.vmem [resolvable:$true] %s17
      %20 = dma.hbm_to_vmem [thread:$0]  %s0, 128, %s18, [#allocation5]
    $region5: #{tpu_custom_call.1} parent=1 // pred_fallthru
      _
    // Predicated region
    $region6: #{tpu_custom_call.1} parent=1 // pred_check
      _
    $region7: #{tpu_custom_call.1} parent=1 // pred_check_branch
      %22 = sbr.rel (0) target = $region9
    $region8: #{tpu_custom_call.1} parent=1 // pred_region
      %s24 = ssub.s32 128, 128
      %25 = vsyncadd [#allocation8], %s24
      %s27 = sshll.u32 [#allocation7], 4
      %s28 = int_to_ptr.vmem [resolvable:$true] %s27
      %30 = dma.hbm_to_vmem [thread:$0]  %s1, 128, %s28, [#allocation8]
    $region9: #{tpu_custom_call.1} parent=1 // pred_fallthru
      _
    // Predicated region
    $region10: #{tpu_custom_call.1} parent=1 // pred_check
      _
    $region11: #{tpu_custom_call.1} parent=1 // pred_check_branch
      %32 = sbr.rel (0) target = $region13
    $region12: #{tpu_custom_call.1} parent=1 // pred_region
      %s34 = ssub.s32 256, 256
      %35 = vsyncadd [#allocation8], %s34
      %s36 = sshll.u32 [#allocation9], 4
      %s37 = int_to_ptr.vmem [resolvable:$true] %s36
      %42 = dma.hbm_to_vmem [thread:$0]  %s2, 256, %s37, [#allocation8], 128, 128, 8
    $region13: #{tpu_custom_call.1} parent=1 // pred_fallthru
      _
    // Predicated region
    $region14: #{tpu_custom_call.1} parent=1 // pred_check
      _
    $region15: #{tpu_custom_call.1} parent=1 // pred_check_branch
      %44 = sbr.rel (0) target = $region17
    $region16: #{tpu_custom_call.1} parent=1 // pred_region
      %45 = dma.done [#allocation5], 128
    $region17: #{tpu_custom_call.1} parent=1 // pred_fallthru
      _
    // Predicated region
    $region18: #{tpu_custom_call.1} parent=1 // pred_check
      _
    $region19: #{tpu_custom_call.1} parent=1 // pred_check_branch
      %47 = sbr.rel (0) target = $region21
    $region20: #{tpu_custom_call.1} parent=1 // pred_region
      %48 = dma.done [#allocation8], 128
    $region21: #{tpu_custom_call.1} parent=1 // pred_fallthru
      _
    // Predicated region
    $region22: #{tpu_custom_call.1} parent=1 // pred_check
      _
    $region23: #{tpu_custom_call.1} parent=1 // pred_check_branch
      %50 = sbr.rel (0) target = $region25
    $region24: #{tpu_custom_call.1} parent=1 // pred_region
      %51 = dma.done [#allocation8], 256
    $region25: #{tpu_custom_call.1} parent=1 // pred_fallthru
      _
    %v52 = vld [vmem:[#allocation4] sm:$0xff]
    %v53 = vmul.f32 %v52, %v52
    %54 = vadd.xlane.f32.xlu0 %v53
    %v55 = vpop.xlane.xlu0 %54
    %v56 = vmax.f32 %v55, 1e-24
    %v57 = vrsqrt.pop %v56
    %v58 = vmul.f32 %v52, %v57
    %p59 = scmp.eq.s32.totalorder 0, 0
    // Predicated region
    $region26: #{tpu_custom_call.1} parent=1 // pred_check
      %p60 = pneg %p59
    $region27: #{tpu_custom_call.1} parent=1 // pred_check_branch
      %62 = sbr.rel (%p60) target = $region29
    $region28: #{tpu_custom_call.1} parent=1 // pred_region
      %v63 = vld [vmem:[#allocation7] sm:$0xff]
      %v64 = vmul.f32 %v63, %v63
      %65 = vadd.xlane.f32.xlu0 %v64
      %v66 = vpop.xlane.xlu0 %65
      %v67 = vmul.f32 %v52, %v63
      %68 = vadd.xlane.f32.xlu0 %v67
      %v69 = vpop.xlane.xlu0 %68
      %v70 = vmul.f32 %v55, %v66
      %v71 = vmax.f32 %v70, 1e-16
      %v72 = vrsqrt.pop %v71
      %v73 = vmul.f32 %v69, %v72
      %vm74 = vcmask 7168
      %75 = vst.msk [vmem:[#allocation3] sm:$0xff] %vm74, %v73
      %v76 = vmul.f32 %v73, 1.442695
      %v77 = vpow.pop %v76
      %v78 = vmul.f32 %v58, %v58
      %79 = vadd.xlane.f32.xlu0 %v78
      %v80 = vpop.xlane.xlu0 %79
      %v81 = vmul.f32 %v80, 1.442695
      %v82 = vpow.pop %v81
      %v83 = vsub.f32 %v77, %v82
      %84 = vst.msk [vmem:[#allocation2] sm:$0xff] %vm74, %v83
    $region29: #{tpu_custom_call.1} parent=1 // pred_fallthru
      _
    %v85 = vld [vmem:[#allocation9] sm:$0xff]
    %v86 = vld [vmem:[#allocation9 + $0x8] sm:$0xff]
    %v87 = vmul.f32 %v85, %v85
    %v88 = vmul.f32 %v86, %v86
    %89 = vadd.xlane.f32.xlu0 %v87
    %v90 = vpop.xlane.xlu0 %89
    %91 = vadd.xlane.f32.xlu0 %v88
    %v92 = vpop.xlane.xlu0 %91
    %v93 = vmax.f32 %v90, 1e-24
    %v94 = vmax.f32 %v92, 1e-24
    %v95 = vrsqrt.pop %v93
    %v96 = vrsqrt.pop %v94
    %v97 = vmul.f32 %v85, %v95
    %v98 = vmul.f32 %v86, %v96
    %99 = vmatprep.subr.mxu0 0.0
    %100 = vmatpush1.xpose.msra.mxu0 %v97
    %101 = vmatprep.subr.mxu0 0.0
    %102 = vmatpush1.xpose.msra.mxu0 %v98
    %103 = vmatprep.subr.mxu0 0.0
    %104 = vmatpush1.xpose.msra.mxu0 0.0
    %105 = vmatprep.subr.mxu0 0.0
    %106 = vmatpush1.xpose.msra.mxu0 0.0
    %107 = vmatprep.subr.mxu0 0.0
    %108 = vmatpush1.xpose.msra.mxu0 0.0
    %109 = vmatprep.subr.mxu0 0.0
    %110 = vmatpush1.xpose.msra.mxu0 0.0
    %111 = vmatprep.subr.mxu0 0.0
    %112 = vmatpush1.xpose.msra.mxu0 0.0
    %113 = vmatprep.subr.mxu0 0.0
    %114 = vmatpush1.xpose.msra.mxu0 0.0
    %115 = vmatprep.subr.mxu0 0.0
    %116 = vmatpush1.xpose.msra.mxu0 0.0
    %117 = vmatprep.subr.mxu0 0.0
    %118 = vmatpush1.xpose.msra.mxu0 0.0
    %119 = vmatprep.subr.mxu0 0.0
    %120 = vmatpush1.xpose.msra.mxu0 0.0
    %121 = vmatprep.subr.mxu0 0.0
    %122 = vmatpush1.xpose.msra.mxu0 0.0
    %123 = vmatprep.subr.mxu0 0.0
    %124 = vmatpush1.xpose.msra.mxu0 0.0
    %125 = vmatprep.subr.mxu0 0.0
    %126 = vmatpush1.xpose.msra.mxu0 0.0
    %127 = vmatprep.subr.mxu0 0.0
    %128 = vmatpush1.xpose.msra.mxu0 0.0
    %129 = vmatprep.subr.mxu0 0.0
    %130 = vmatpush1.xpose.msra.mxu0 0.0
    %131 = vmatprep.subr.mxu0 0.0
    %132 = vmatpush1.xpose.msra.mxu0 0.0
    %133 = vmatprep.subr.mxu0 0.0
    %134 = vmatpush1.xpose.msra.mxu0 0.0
    %135 = vmatprep.subr.mxu0 0.0
    %136 = vmatpush1.xpose.msra.mxu0 0.0
    %137 = vmatprep.subr.mxu0 0.0
    %138 = vmatpush1.xpose.msra.mxu0 0.0
    %139 = vmatprep.subr.mxu0 0.0
    %140 = vmatpush1.xpose.msra.mxu0 0.0
    %141 = vmatprep.subr.mxu0 0.0
    %142 = vmatpush1.xpose.msra.mxu0 0.0
    %143 = vmatprep.subr.mxu0 0.0
    %144 = vmatpush1.xpose.msra.mxu0 0.0
    %145 = vmatprep.subr.mxu0 0.0
    %146 = vmatpush1.xpose.msra.mxu0 0.0
    %147 = vmatprep.subr.mxu0 0.0
    %148 = vmatpush1.xpose.msra.mxu0 0.0
    %149 = vmatprep.subr.mxu0 0.0
    %150 = vmatpush1.xpose.msra.mxu0 0.0
    %151 = vmatprep.subr.mxu0 0.0
    %152 = vmatpush1.xpose.msra.mxu0 0.0
    %153 = vmatprep.subr.mxu0 0.0
    %154 = vmatpush1.xpose.msra.mxu0 0.0
    %155 = vmatprep.subr.mxu0 0.0
    %156 = vmatpush1.xpose.msra.mxu0 0.0
    %157 = vmatprep.subr.mxu0 0.0
    %158 = vmatpush1.xpose.msra.mxu0 0.0
    %159 = vmatprep.subr.mxu0 0.0
    %160 = vmatpush1.xpose.msra.mxu0 0.0
    %161 = vmatprep.subr.mxu0 0.0
    %162 = vmatpush1.xpose.msra.mxu0 0.0
    %163 = vmatprep.mubr.f32.mxu0 0.0
    %164 = vmatmul.mubr.f32.gmra.mrb[0].mxu0 %v58
    %v165 = vpop.f32.mrb[0].mxu0
    %v166 = vadd.f32 0.0, %v165
    %v167 = vpop.f32.mrb[0].mxu0
    %168 = vdwg.mxu0
    %v169 = vld [vmem:[#allocation2] sm:$0xff]
    %v170 = vmul.f32 %v166, 1.442695
    %v171 = vpow.pop %v170
    %vm172 = vcmask 130048
    %v173 = vsel %vm172, %v171, 0.0
    %174 = vadd.xlane.f32.xlu0 %v173
    %v175 = vpop.xlane.xlu0 %174
    %v176 = vadd.f32 %v169, %v175
    %vm177 = vcmask 7168
    %178 = vst.msk [vmem:[#allocation2] sm:$0xff] %vm177, %v176
    // Predicated region
    $region30: #{tpu_custom_call.1} parent=1 // pred_check
      %p179 = pneg %p59
    $region31: #{tpu_custom_call.1} parent=1 // pred_check_branch
      %181 = sbr.rel (%p179) target = $region33
    $region32: #{tpu_custom_call.1} parent=1 // pred_region
      %v182 = vld [vmem:[#allocation2] sm:$0xff]
      %v183 = vlog2.pop %v182
      %v184 = vmul.f32 %v183, 0.6931472
      %v185 = vld [vmem:[#allocation3] sm:$0xff]
      %v186 = vsub.f32 %v184, %v185
      %v187 = vsel %vm177, %v186, 0.0
      %188 = vadd.xlane.f32.xlu0 %v187
      %v189 = vpop.xlane.xlu0 %188
      %v190 = vrot.slane %v189, 4
      %v191 = vadd.f32 %v189, %v190
      %v192 = vrot.slane %v191, 2
      %v193 = vadd.f32 %v191, %v192
      %v194 = vrot.slane %v193, 1
      %v195 = vadd.f32 %v193, %v194
      %s196 = vtos %v195
      %v197 = vstv %s196
      %v198 = vadd.f32 %v197, 0.0
      %199 = vst [vmem:[#allocation10] sm:$0xff] %v198
    $region33: #{tpu_custom_call.1} parent=1 // pred_fallthru
      _
    // Predicated region
    $region34: #{tpu_custom_call.1} parent=1 // pred_check
      _
    $region35: #{tpu_custom_call.1} parent=1 // pred_check_branch
      %201 = sbr.rel (0) target = $region37
    $region36: #{tpu_custom_call.1} parent=1 // pred_region
      %s203 = ssub.s32 128, 128
      %204 = vsyncadd [#allocation6], %s203
      %s206 = sshll.u32 [#allocation10], 4
      %s207 = int_to_ptr.vmem [resolvable:$true] %s206
      %209 = dma.vmem_to_hbm [thread:$0]  %s207, 128, %s3, [#allocation6]
    $region37: #{tpu_custom_call.1} parent=1 // pred_fallthru
      _
    // Predicated region
    $region38: #{tpu_custom_call.1} parent=1 // pred_check
      _
    $region39: #{tpu_custom_call.1} parent=1 // pred_check_branch
      %211 = sbr.rel (0) target = $region41
    $region40: #{tpu_custom_call.1} parent=1 // pred_region
      %212 = dma.done [#allocation6], 128
    $region41: #{tpu_custom_call.1} parent=1 // pred_fallthru
      _
    %213 = vsyncpa [#allocation5], 1
    %214 = vsyncpa [#allocation8], 1
    %215 = vsyncpa [#allocation6], 1

</llo_original>
